<compile_context>
chip_gen: v7x
topology: tpu7x:2x2x1
jax: 0.10.0
libtpu: 0.0.40
codegen_flags: <defaults>
</compile_context>

<pallas_src>
import functools
import math

import jax
import jax.numpy as jnp
from jax.experimental import pallas as pl
from jax.experimental.pallas import tpu as pltpu


def _round_up(x, m):
    return (x + m - 1) // m * m


def _view_avg_kernel(x_ref, w_ref, b_ref, p_ref, aux_ref, pooled_ref):
    # x_ref:      (TM, TK)  bf16  rows = flattened (batch, view)
    # w_ref:      (TK, TE)  bf16
    # b_ref:      (1, TE)   f32
    # p_ref:      (BT, TM)  f32   averaging matrix: P[i, j] = 1/V if j // V == i else 0
    # aux_ref:    (TM, TE)  f32   resident across the K grid axis (accumulator)
    # pooled_ref: (BT, TE)  f32   lane/sublane-dense pooled tile
    k = pl.program_id(2)

    @pl.when(k == 0)
    def _init():
        # Bias-initialized accumulator: saves a separate finalize bias pass.
        aux_ref[...] = jnp.broadcast_to(b_ref[...], aux_ref.shape)

    # bf16 MXU matmul, f32 accumulation directly into the resident aux block.
    aux_ref[...] += jnp.dot(
        x_ref[...], w_ref[...], preferred_element_type=jnp.float32
    )

    @pl.when(k == pl.num_programs(2) - 1)
    def _finalize():
        # View-mean over groups of V consecutive rows as a small MXU matmul.
        pooled_ref[...] = jnp.dot(
            p_ref[...], aux_ref[...], preferred_element_type=jnp.float32
        )


@functools.partial(jax.jit, static_argnames=("compute_dtype",))
def view_avg_aggregate(mvimages, weight, bias, compute_dtype=jnp.bfloat16):
    """mvimages: (B, V, C, D, H, W); weight: (K, E); bias: (E,).

    Returns (pooled_view.squeeze(), aux) matching the PyTorch module (aux as (B, V, E)).
    """
    B, V, C, D, H, W = mvimages.shape
    K = C * D * H * W
    E = weight.shape[1]
    f32 = jnp.float32

    # ---- tile selection -----------------------------------------------------
    E_pad = _round_up(E, 128)                 # lane-dense output columns
    te = min(E_pad, 512)                      # E tile
    E_pad = _round_up(E_pad, te)

    K_pad = _round_up(K, 128)
    if K_pad <= 2048:
        tk = K_pad                            # single K step for small backbones
    else:
        tk = 1024                             # K-tiled reduction for real backbones
        K_pad = _round_up(K, tk)

    # Batches per M tile: target ~256 MXU rows, keep pooled tile sublane-dense
    # (BT a multiple of 8 -> TM = BT*V is a multiple of 8 too).
    bt_target = max(1, 256 // V)
    BT = _round_up(min(bt_target, _round_up(B, 8)), 8)
    TM = BT * V                               # rows per tile
    B_pad = _round_up(B, BT)
    M = B * V
    M_pad = B_pad * V

    grid = (M_pad // TM, E_pad // te, K_pad // tk)

    # ---- operand preparation --------------------------------------------------
    x = mvimages.reshape(M, K).astype(compute_dtype)
    x = jnp.pad(x, ((0, M_pad - M), (0, K_pad - K)))
    w = jnp.pad(weight.astype(compute_dtype), ((0, K_pad - K), (0, E_pad - E)))
    b2 = jnp.pad(bias.astype(f32), (0, E_pad - E)).reshape(1, E_pad)
    # Averaging matrix over the V views inside one M tile (rows sum to 1 -> bias preserved).
    rows = jnp.arange(BT, dtype=jnp.int32)[:, None]
    cols = jnp.arange(TM, dtype=jnp.int32)[None, :]
    pool_mat = jnp.where(cols // V == rows, 1.0 / V, 0.0).astype(f32)

    # ---- VMEM budget: double-buffered input tiles + resident output tiles ------
    isz = jnp.dtype(compute_dtype).itemsize
    vmem_est = (2 * TM * tk * isz            # x tiles (double-buffered)
                + 2 * tk * te * isz          # weight tiles (double-buffered)
                + TM * te * 4                # aux accumulator (resident)
                + BT * te * 4                # pooled tile (resident)
                + te * 4                     # bias
                + BT * TM * 4)               # averaging matrix
    vmem_limit = int(min(64 * 1024 * 1024, max(32 * 1024 * 1024, 2 * vmem_est)))

    aux_p, pooled_p = pl.pallas_call(
        _view_avg_kernel,
        out_shape=(
            jax.ShapeDtypeStruct((M_pad, E_pad), f32),   # aux (flattened rows)
            jax.ShapeDtypeStruct((B_pad, E_pad), f32),   # pooled
        ),
        grid_spec=pltpu.PrefetchScalarGridSpec(
            num_scalar_prefetch=0,
            grid=grid,
            in_specs=[
                pl.BlockSpec((TM, tk), lambda m, e, k: (m, k)),     # x
                pl.BlockSpec((tk, te), lambda m, e, k: (k, e)),     # weight
                pl.BlockSpec((1, te), lambda m, e, k: (0, e)),      # bias (tiny, constant per e)
                pl.BlockSpec((BT, TM), lambda m, e, k: (0, 0)),     # averaging matrix
            ],
            out_specs=(
                pl.BlockSpec((TM, te), lambda m, e, k: (m, e)),     # aux: resident over K
                pl.BlockSpec((BT, te), lambda m, e, k: (m, e)),     # pooled: dense stores
            ),
        ),
        compiler_params=pltpu.CompilerParams(
            dimension_semantics=("parallel", "parallel", "arbitrary"),
            vmem_limit_bytes=vmem_limit,
        ),
    )(x, w, b2, pool_mat)

    aux = aux_p[:M, :E].reshape(B, V, E)
    pooled = pooled_p[:B, :E]
    pooled_view = jnp.squeeze(pooled)   # matches torch .squeeze()
    return pooled_view, aux


def _reference(mvimages, weight, bias, compute_dtype=jnp.bfloat16):
    """Matched-precision reference: bf16 MXU inputs, f32 accumulation (as in the kernel)."""
    B, V = mvimages.shape[:2]
    K = math.prod(mvimages.shape[2:])
    x = mvimages.reshape(B, V, K).astype(compute_dtype)
    w = weight.astype(compute_dtype)
    aux = jnp.einsum("bvk,ke->bve", x, w, preferred_element_type=jnp.float32)
    aux = aux + bias.astype(jnp.float32)[None, None, :]
    pooled = jnp.mean(aux, axis=1)
    return jnp.squeeze(pooled), aux


if __name__ == "__main__":
    # Small shapes consistent with the (B, V, C, D, H, W) forward contract.
    B, V, C, D, H, W = 2, 4, 4, 2, 8, 8
    K = C * D * H * W      # 512
    E = 128                # backbone output features

    key = jax.random.PRNGKey(0)
    k_x, k_w, k_b = jax.random.split(key, 3)
    mvimages = jax.random.normal(k_x, (B, V, C, D, H, W), dtype=jnp.float32)
    weight = jax.random.normal(k_w, (K, E), dtype=jnp.float32) * (1.0 / jnp.sqrt(K))
    bias = jax.random.normal(k_b, (E,), dtype=jnp.float32) * 0.01

    pooled, aux = view_avg_aggregate(mvimages, weight, bias)
    pooled = jax.block_until_ready(pooled)
    aux = jax.block_until_ready(aux)

    ref_pooled, ref_aux = _reference(mvimages, weight, bias)
    assert pooled.shape == ref_pooled.shape, (pooled.shape, ref_pooled.shape)
    assert aux.shape == (B, V, E), aux.shape
    assert jnp.allclose(pooled, ref_pooled, atol=2e-3, rtol=2e-3), \
        float(jnp.max(jnp.abs(pooled - ref_pooled)))
    assert jnp.allclose(aux, ref_aux, atol=2e-3, rtol=2e-3), \
        float(jnp.max(jnp.abs(aux - ref_aux)))

    print("KERNEL_OK")
</pallas_src>

<mosaic_0001>
module attributes {stable_mosaic.version = 11 : i64} {
  func.func @_view_avg_kernel(%arg0: i32, %arg1: i32, %arg2: i32, %arg3: memref<32x512xbf16, #tpu.memory_space<vmem>>, %arg4: memref<512x128xbf16, #tpu.memory_space<vmem>>, %arg5: memref<1x128xf32, #tpu.memory_space<vmem>>, %arg6: memref<8x32xf32, #tpu.memory_space<vmem>>, %arg7: memref<32x128xf32, #tpu.memory_space<vmem>>, %arg8: memref<8x128xf32, #tpu.memory_space<vmem>>) attributes {dimension_semantics = [#tpu.dimension_semantics<parallel>, #tpu.dimension_semantics<parallel>, #tpu.dimension_semantics<arbitrary>], iteration_bounds = array<i64: 1, 1, 1>, scalar_prefetch = 0 : i64, scratch_operands = 0 : i64, tpu.core_type = #tpu.core_type<tc>, window_params = [{transform_indices = @transform_0, window_bounds = array<i64: 32, 512>}, {transform_indices = @transform_1, window_bounds = array<i64: 512, 128>}, {transform_indices = @transform_2, window_bounds = array<i64: 1, 128>}, {pipeline_mode = #tpu.pipeline_mode<synchronous>, transform_indices = @transform_3, window_bounds = array<i64: 8, 32>}, {transform_indices = @transform_4, window_bounds = array<i64: 32, 128>}, {transform_indices = @transform_5, window_bounds = array<i64: 8, 128>}]} {
    %c0_i32 = arith.constant 0 : i32
    %0 = arith.cmpi eq, %arg2, %c0_i32 : i32
    %1 = arith.extui %0 : i1 to i32
    %c0_i32_0 = arith.constant 0 : i32
    %2 = arith.cmpi ne, %1, %c0_i32_0 : i32
    scf.if %2 {
      %c0_10 = arith.constant 0 : index
      %c0_11 = arith.constant 0 : index
      %12 = vector.load %arg5[%c0_10, %c0_11] : memref<1x128xf32, #tpu.memory_space<vmem>>, vector<1x128xf32>
      %13 = vector.shape_cast %12 : vector<1x128xf32> to vector<1x128xf32>
      %14 = vector.broadcast %13 : vector<1x128xf32> to vector<32x128xf32>
      %c0_12 = arith.constant 0 : index
      %c0_13 = arith.constant 0 : index
      %15 = vector.load %arg7[%c0_12, %c0_13] : memref<32x128xf32, #tpu.memory_space<vmem>>, vector<32x128xf32>
      tpu.vector_store %arg7[%c0_12, %c0_13], %14 {strides = array<i32>} : memref<32x128xf32, #tpu.memory_space<vmem>>, vector<32x128xf32>,
    } else {
    }
    %c0 = arith.constant 0 : index
    %c0_1 = arith.constant 0 : index
    %3 = vector.load %arg7[%c0, %c0_1] : memref<32x128xf32, #tpu.memory_space<vmem>>, vector<32x128xf32>
    %c0_2 = arith.constant 0 : index
    %c0_3 = arith.constant 0 : index
    %4 = vector.load %arg3[%c0_2, %c0_3] : memref<32x512xbf16, #tpu.memory_space<vmem>>, vector<32x512xbf16>
    %c0_4 = arith.constant 0 : index
    %c0_5 = arith.constant 0 : index
    %5 = vector.load %arg4[%c0_4, %c0_5] : memref<512x128xbf16, #tpu.memory_space<vmem>>, vector<512x128xbf16>
    %cst = arith.constant dense<0.000000e+00> : vector<32x128xf32>
    %6 = tpu.matmul %4, %5, %cst {dimension_numbers = #tpu.dot_dimension_numbers<[1], [0], [0], [1], [0, 0, 1, 1], [], []>} : vector<32x512xbf16>, vector<512x128xbf16>, vector<32x128xf32> -> vector<32x128xf32>
    %7 = arith.addf %3, %6 : vector<32x128xf32>
    %c0_6 = arith.constant 0 : index
    %c0_7 = arith.constant 0 : index
    %8 = vector.load %arg7[%c0_6, %c0_7] : memref<32x128xf32, #tpu.memory_space<vmem>>, vector<32x128xf32>
    tpu.vector_store %arg7[%c0_6, %c0_7], %7 {strides = array<i32>} : memref<32x128xf32, #tpu.memory_space<vmem>>, vector<32x128xf32>,
    %c0_i32_8 = arith.constant 0 : i32
    %9 = arith.cmpi eq, %arg2, %c0_i32_8 : i32
    %10 = arith.extui %9 : i1 to i32
    %c0_i32_9 = arith.constant 0 : i32
    %11 = arith.cmpi ne, %10, %c0_i32_9 : i32
    scf.if %11 {
      %c0_10 = arith.constant 0 : index
      %c0_11 = arith.constant 0 : index
      %12 = vector.load %arg6[%c0_10, %c0_11] : memref<8x32xf32, #tpu.memory_space<vmem>>, vector<8x32xf32>
      %c0_12 = arith.constant 0 : index
      %c0_13 = arith.constant 0 : index
      %13 = vector.load %arg7[%c0_12, %c0_13] : memref<32x128xf32, #tpu.memory_space<vmem>>, vector<32x128xf32>
      %cst_14 = arith.constant dense<0.000000e+00> : vector<8x128xf32>
      %14 = tpu.matmul %12, %13, %cst_14 {dimension_numbers = #tpu.dot_dimension_numbers<[1], [0], [0], [1], [0, 0, 1, 1], [], []>} : vector<8x32xf32>, vector<32x128xf32>, vector<8x128xf32> -> vector<8x128xf32>
      %c0_15 = arith.constant 0 : index
      %c0_16 = arith.constant 0 : index
      %15 = vector.load %arg8[%c0_15, %c0_16] : memref<8x128xf32, #tpu.memory_space<vmem>>, vector<8x128xf32>
      tpu.vector_store %arg8[%c0_15, %c0_16], %14 {strides = array<i32>} : memref<8x128xf32, #tpu.memory_space<vmem>>, vector<8x128xf32>,
    } else {
    }
    return
  }
  func.func @transform_0(%arg0: i32, %arg1: i32, %arg2: i32) -> (i32, i32) {
    %c0_i32 = arith.constant 0 : i32
    return %arg0, %arg2 : i32, i32
  }
  func.func @transform_1(%arg0: i32, %arg1: i32, %arg2: i32) -> (i32, i32) {
    %c0_i32 = arith.constant 0 : i32
    return %arg2, %arg1 : i32, i32
  }
  func.func @transform_2(%arg0: i32, %arg1: i32, %arg2: i32) -> (i32, i32) {
    %c0_i32 = arith.constant 0 : i32
    %c0_i32_0 = arith.constant 0 : i32
    return %c0_i32, %arg1 : i32, i32
  }
  func.func @transform_3(%arg0: i32, %arg1: i32, %arg2: i32) -> (i32, i32) {
    %c0_i32 = arith.constant 0 : i32
    %c0_i32_0 = arith.constant 0 : i32
    %c0_i32_1 = arith.constant 0 : i32
    return %c0_i32, %c0_i32_0 : i32, i32
  }
  func.func @transform_4(%arg0: i32, %arg1: i32, %arg2: i32) -> (i32, i32) {
    %c0_i32 = arith.constant 0 : i32
    return %arg0, %arg1 : i32, i32
  }
  func.func @transform_5(%arg0: i32, %arg1: i32, %arg2: i32) -> (i32, i32) {
    %c0_i32 = arith.constant 0 : i32
    return %arg0, %arg1 : i32, i32
  }
}

</mosaic_0001>

<llo_original>
// kernel: view_avg_aggregate.1
$region0: #{view_avg_aggregate.1}
  #allocation0 [shape = 'u32[]', space=smem, size = 0x4, offset = 0x4, fixed_abs, tag = 'smem constant byte address 0x4 - core index']
  #allocation1 [shape = 'u32[144,128]{1,0:T(1,128)}', space=vmem, size = 0x12000, scoped, tag = 'internal scratch']
  %s0 = inlined_call_operand.vmem [shape: bf16[32,512], index: 0, kind: input, shape index: {}]
  %s1 = inlined_call_operand.vmem [shape: bf16[512,128], index: 1, kind: input, shape index: {}]
  %s2 = inlined_call_operand.vmem [shape: f32[1,128], index: 2, kind: input, shape index: {}]
  %s3 = inlined_call_operand.vmem [shape: f32[8,32], index: 3, kind: input, shape index: {}]
  %s4 = inlined_call_operand.vmem [shape: f32[32,128], index: 4, kind: output, shape index: {0}]
  %s5 = inlined_call_operand.vmem [shape: f32[8,128], index: 5, kind: output, shape index: {1}]
  %6 = xla_tuple %s4, %s5
  %s7 = sld [smem:[#allocation0]]
  $region42: #{view_avg_aggregate.1} parent=0
    _
  %s9 = ssub.s32 1, %s7
  %s10 = scalar_select 0, %s9, %s7
  // Predicated region
  $region2: #{view_avg_aggregate.1} parent=0 // pred_check
    _
  $region3: #{view_avg_aggregate.1} parent=0 // pred_check_branch
    %12 = sbr.rel (0) target = $region5
  $region4: #{view_avg_aggregate.1} parent=0 // pred_region
    _
  $region5: #{view_avg_aggregate.1} parent=0 // pred_fallthru
    _
  // Predicated region
  $region6: #{view_avg_aggregate.1} parent=0 // pred_check
    _
  $region7: #{view_avg_aggregate.1} parent=0 // pred_check_branch
    %14 = sbr.rel (0) target = $region9
  $region8: #{view_avg_aggregate.1} parent=0 // pred_region
    _
  $region9: #{view_avg_aggregate.1} parent=0 // pred_fallthru
    _
  // Predicated region
  $region10: #{view_avg_aggregate.1} parent=0 // pred_check
    _
  $region11: #{view_avg_aggregate.1} parent=0 // pred_check_branch
    %16 = sbr.rel (0) target = $region13
  $region12: #{view_avg_aggregate.1} parent=0 // pred_region
    _
  $region13: #{view_avg_aggregate.1} parent=0 // pred_fallthru
    _
  // Predicated region
  $region14: #{view_avg_aggregate.1} parent=0 // pred_check
    _
  $region15: #{view_avg_aggregate.1} parent=0 // pred_check_branch
    %18 = sbr.rel (0) target = $region17
  $region16: #{view_avg_aggregate.1} parent=0 // pred_region
    _
  $region17: #{view_avg_aggregate.1} parent=0 // pred_fallthru
    _
  %p20 = scmp.eq.s32.totalorder 0, 0
  // Predicated region
  $region18: #{view_avg_aggregate.1} parent=0 // pred_check
    %p21 = pneg %p20
  $region19: #{view_avg_aggregate.1} parent=0 // pred_check_branch
    %23 = sbr.rel (%p21) target = $region21
  $region20: #{view_avg_aggregate.1} parent=0 // pred_region
    %v24 = vld [vmem:[%s2] sm:$0x1]
    %v26 = vlaneseq
    %v27 = vshrl.u32 %v26, 7
    %v28 = vsub.s32 0, %v27
    %v29 = vrot.slane %v24, %v28
    %31 = vst [vmem:[%s4] sm:$0xff] %v29
    %32 = vst [vmem:[%s4 + $0x8] sm:$0xff] %v29
    %33 = vst [vmem:[%s4 + $0x10] sm:$0xff] %v29
    %34 = vst [vmem:[%s4 + $0x18] sm:$0xff] %v29
  $region21: #{view_avg_aggregate.1} parent=0 // pred_fallthru
    _
  %v35 = vld [vmem:[%s4] sm:$0xff]
  %v36 = vld [vmem:[%s4 + $0x8] sm:$0xff]
  %v37 = vld [vmem:[%s4 + $0x10] sm:$0xff]
  %v38 = vld [vmem:[%s4 + $0x18] sm:$0xff]
  %v39 = vld [vmem:[%s0] sm:$0xff]
  %v40 = vld [vmem:[%s0 + $0x8] sm:$0xff]
  %v41 = vld [vmem:[%s0 + $0x10] sm:$0xff]
  %v42 = vld [vmem:[%s0 + $0x18] sm:$0xff]
  %v43 = vld [vmem:[%s0 + $0x20] sm:$0xff]
  %v44 = vld [vmem:[%s0 + $0x28] sm:$0xff]
  %v45 = vld [vmem:[%s0 + $0x30] sm:$0xff]
  %v46 = vld [vmem:[%s0 + $0x38] sm:$0xff]
  %v47 = vld [vmem:[%s1] sm:$0xf]
  %v48 = vld [vmem:[%s1 + $0x4] sm:$0xf]
  %v49 = vld [vmem:[%s1 + $0x8] sm:$0xf]
  %v50 = vld [vmem:[%s1 + $0xc] sm:$0xf]
  %v51 = vld [vmem:[%s1 + $0x10] sm:$0xf]
  %v52 = vld [vmem:[%s1 + $0x14] sm:$0xf]
  %v53 = vld [vmem:[%s1 + $0x18] sm:$0xf]
  %v54 = vld [vmem:[%s1 + $0x1c] sm:$0xf]
  %v55 = vld [vmem:[%s1 + $0x20] sm:$0xf]
  %v56 = vld [vmem:[%s1 + $0x24] sm:$0xf]
  %v57 = vld [vmem:[%s1 + $0x28] sm:$0xf]
  %v58 = vld [vmem:[%s1 + $0x2c] sm:$0xf]
  %v59 = vld [vmem:[%s1 + $0x30] sm:$0xf]
  %v60 = vld [vmem:[%s1 + $0x34] sm:$0xf]
  %v61 = vld [vmem:[%s1 + $0x38] sm:$0xf]
  %v62 = vld [vmem:[%s1 + $0x3c] sm:$0xf]
  %v63 = vld [vmem:[%s1 + $0x40] sm:$0xf]
  %v64 = vld [vmem:[%s1 + $0x44] sm:$0xf]
  %v65 = vld [vmem:[%s1 + $0x48] sm:$0xf]
  %v66 = vld [vmem:[%s1 + $0x4c] sm:$0xf]
  %v67 = vld [vmem:[%s1 + $0x50] sm:$0xf]
  %v68 = vld [vmem:[%s1 + $0x54] sm:$0xf]
  %v69 = vld [vmem:[%s1 + $0x58] sm:$0xf]
  %v70 = vld [vmem:[%s1 + $0x5c] sm:$0xf]
  %v71 = vld [vmem:[%s1 + $0x60] sm:$0xf]
  %v72 = vld [vmem:[%s1 + $0x64] sm:$0xf]
  %v73 = vld [vmem:[%s1 + $0x68] sm:$0xf]
  %v74 = vld [vmem:[%s1 + $0x6c] sm:$0xf]
  %v75 = vld [vmem:[%s1 + $0x70] sm:$0xf]
  %v76 = vld [vmem:[%s1 + $0x74] sm:$0xf]
  %v77 = vld [vmem:[%s1 + $0x78] sm:$0xf]
  %v78 = vld [vmem:[%s1 + $0x7c] sm:$0xf]
  %v79 = vld [vmem:[%s1 + $0x80] sm:$0xf]
  %v80 = vld [vmem:[%s1 + $0x84] sm:$0xf]
  %v81 = vld [vmem:[%s1 + $0x88] sm:$0xf]
  %v82 = vld [vmem:[%s1 + $0x8c] sm:$0xf]
  %v83 = vld [vmem:[%s1 + $0x90] sm:$0xf]
  %v84 = vld [vmem:[%s1 + $0x94] sm:$0xf]
  %v85 = vld [vmem:[%s1 + $0x98] sm:$0xf]
  %v86 = vld [vmem:[%s1 + $0x9c] sm:$0xf]
  %v87 = vld [vmem:[%s1 + $0xa0] sm:$0xf]
  %v88 = vld [vmem:[%s1 + $0xa4] sm:$0xf]
  %v89 = vld [vmem:[%s1 + $0xa8] sm:$0xf]
  %v90 = vld [vmem:[%s1 + $0xac] sm:$0xf]
  %v91 = vld [vmem:[%s1 + $0xb0] sm:$0xf]
  %v92 = vld [vmem:[%s1 + $0xb4] sm:$0xf]
  %v93 = vld [vmem:[%s1 + $0xb8] sm:$0xf]
  %v94 = vld [vmem:[%s1 + $0xbc] sm:$0xf]
  %v95 = vld [vmem:[%s1 + $0xc0] sm:$0xf]
  %v96 = vld [vmem:[%s1 + $0xc4] sm:$0xf]
  %v97 = vld [vmem:[%s1 + $0xc8] sm:$0xf]
  %v98 = vld [vmem:[%s1 + $0xcc] sm:$0xf]
  %v99 = vld [vmem:[%s1 + $0xd0] sm:$0xf]
  %v100 = vld [vmem:[%s1 + $0xd4] sm:$0xf]
  %v101 = vld [vmem:[%s1 + $0xd8] sm:$0xf]
  %v102 = vld [vmem:[%s1 + $0xdc] sm:$0xf]
  %v103 = vld [vmem:[%s1 + $0xe0] sm:$0xf]
  %v104 = vld [vmem:[%s1 + $0xe4] sm:$0xf]
  %v105 = vld [vmem:[%s1 + $0xe8] sm:$0xf]
  %v106 = vld [vmem:[%s1 + $0xec] sm:$0xf]
  %v107 = vld [vmem:[%s1 + $0xf0] sm:$0xf]
  %v108 = vld [vmem:[%s1 + $0xf4] sm:$0xf]
  %v109 = vld [vmem:[%s1 + $0xf8] sm:$0xf]
  %v110 = vld [vmem:[%s1 + $0xfc] sm:$0xf]
  %v119 = vunpack.c.l.b16 %v39
  %v120 = vunpack.c.h.b16 %v39
  %v121 = vunpack.c.l.b16 %v40
  %v122 = vunpack.c.h.b16 %v40
  %v123 = vunpack.c.l.b16 %v41
  %v124 = vunpack.c.h.b16 %v41
  %v125 = vunpack.c.l.b16 %v42
  %v126 = vunpack.c.h.b16 %v42
  %v127 = vunpack.c.l.b16 %v43
  %v128 = vunpack.c.h.b16 %v43
  %v129 = vunpack.c.l.b16 %v44
  %v130 = vunpack.c.h.b16 %v44
  %v131 = vunpack.c.l.b16 %v45
  %v132 = vunpack.c.h.b16 %v45
  %v133 = vunpack.c.l.b16 %v46
  %v134 = vunpack.c.h.b16 %v46
  %v135 = vpack.c.b16 %v123, %v119
  %v136 = vpack.c.b16 %v124, %v120
  %v137 = vpack.c.b16 %v125, %v121
  %v138 = vpack.c.b16 %v126, %v122
  %v139 = vpack.c.b16 %v131, %v127
  %v140 = vpack.c.b16 %v132, %v128
  %v141 = vpack.c.b16 %v133, %v129
  %v142 = vpack.c.b16 %v134, %v130
  %v215 = vunpack.c.l.b16 %v47
  %v216 = vunpack.c.l.b16 %v48
  %v217 = vunpack.c.l.b16 %v49
  %v218 = vunpack.c.l.b16 %v50
  %v219 = vunpack.c.l.b16 %v51
  %v220 = vunpack.c.l.b16 %v52
  %v221 = vunpack.c.l.b16 %v53
  %v222 = vunpack.c.l.b16 %v54
  %v223 = vunpack.c.l.b16 %v55
  %v224 = vunpack.c.l.b16 %v56
  %v225 = vunpack.c.l.b16 %v57
  %v226 = vunpack.c.l.b16 %v58
  %v227 = vunpack.c.l.b16 %v59
  %v228 = vunpack.c.l.b16 %v60
  %v229 = vunpack.c.l.b16 %v61
  %v230 = vunpack.c.l.b16 %v62
  %v231 = vunpack.c.l.b16 %v63
  %v232 = vunpack.c.l.b16 %v64
  %v233 = vunpack.c.l.b16 %v65
  %v234 = vunpack.c.l.b16 %v66
  %v235 = vunpack.c.l.b16 %v67
  %v236 = vunpack.c.l.b16 %v68
  %v237 = vunpack.c.l.b16 %v69
  %v238 = vunpack.c.l.b16 %v70
  %v239 = vunpack.c.l.b16 %v71
  %v240 = vunpack.c.l.b16 %v72
  %v241 = vunpack.c.l.b16 %v73
  %v242 = vunpack.c.l.b16 %v74
  %v243 = vunpack.c.l.b16 %v75
  %v244 = vunpack.c.l.b16 %v76
  %v245 = vunpack.c.l.b16 %v77
  %v246 = vunpack.c.l.b16 %v78
  %v247 = vunpack.c.l.b16 %v79
  %v248 = vunpack.c.l.b16 %v80
  %v249 = vunpack.c.l.b16 %v81
  %v250 = vunpack.c.l.b16 %v82
  %v251 = vunpack.c.l.b16 %v83
  %v252 = vunpack.c.l.b16 %v84
  %v253 = vunpack.c.l.b16 %v85
  %v254 = vunpack.c.l.b16 %v86
  %v255 = vunpack.c.l.b16 %v87
  %v256 = vunpack.c.l.b16 %v88
  %v257 = vunpack.c.l.b16 %v89
  %v258 = vunpack.c.l.b16 %v90
  %v259 = vunpack.c.l.b16 %v91
  %v260 = vunpack.c.l.b16 %v92
  %v261 = vunpack.c.l.b16 %v93
  %v262 = vunpack.c.l.b16 %v94
  %v263 = vunpack.c.l.b16 %v95
  %v264 = vunpack.c.l.b16 %v96
  %v265 = vunpack.c.l.b16 %v97
  %v266 = vunpack.c.l.b16 %v98
  %v267 = vunpack.c.l.b16 %v99
  %v268 = vunpack.c.l.b16 %v100
  %v269 = vunpack.c.l.b16 %v101
  %v270 = vunpack.c.l.b16 %v102
  %v271 = vunpack.c.l.b16 %v103
  %v272 = vunpack.c.l.b16 %v104
  %v273 = vunpack.c.l.b16 %v105
  %v274 = vunpack.c.l.b16 %v106
  %v275 = vunpack.c.l.b16 %v107
  %v276 = vunpack.c.l.b16 %v108
  %v277 = vunpack.c.l.b16 %v109
  %v278 = vunpack.c.l.b16 %v110
  %v279 = vpack.c.b16 %v216, %v215
  %v280 = vpack.c.b16 %v218, %v217
  %v281 = vpack.c.b16 %v220, %v219
  %v282 = vpack.c.b16 %v222, %v221
  %v283 = vpack.c.b16 %v224, %v223
  %v284 = vpack.c.b16 %v226, %v225
  %v285 = vpack.c.b16 %v228, %v227
  %v286 = vpack.c.b16 %v230, %v229
  %v287 = vpack.c.b16 %v232, %v231
  %v288 = vpack.c.b16 %v234, %v233
  %v289 = vpack.c.b16 %v236, %v235
  %v290 = vpack.c.b16 %v238, %v237
  %v291 = vpack.c.b16 %v240, %v239
  %v292 = vpack.c.b16 %v242, %v241
  %v293 = vpack.c.b16 %v244, %v243
  %v294 = vpack.c.b16 %v246, %v245
  %v295 = vpack.c.b16 %v248, %v247
  %v296 = vpack.c.b16 %v250, %v249
  %v297 = vpack.c.b16 %v252, %v251
  %v298 = vpack.c.b16 %v254, %v253
  %v299 = vpack.c.b16 %v256, %v255
  %v300 = vpack.c.b16 %v258, %v257
  %v301 = vpack.c.b16 %v260, %v259
  %v302 = vpack.c.b16 %v262, %v261
  %v303 = vpack.c.b16 %v264, %v263
  %v304 = vpack.c.b16 %v266, %v265
  %v305 = vpack.c.b16 %v268, %v267
  %v306 = vpack.c.b16 %v270, %v269
  %v307 = vpack.c.b16 %v272, %v271
  %v308 = vpack.c.b16 %v274, %v273
  %v309 = vpack.c.b16 %v276, %v275
  %v310 = vpack.c.b16 %v278, %v277
  %343 = vmatprep.subr.bf16.mxu0 0
  %344 = vmatpush1.bf16.msra.mxu0 %v279
  %345 = vmatprep.subr.bf16.mxu0 0
  %346 = vmatpush1.bf16.msra.mxu0 %v280
  %347 = vmatprep.subr.bf16.mxu0 0
  %348 = vmatpush1.bf16.msra.mxu0 %v281
  %349 = vmatprep.subr.bf16.mxu0 0
  %350 = vmatpush1.bf16.msra.mxu0 %v282
  %351 = vmatprep.subr.bf16.mxu0 0
  %352 = vmatpush1.bf16.msra.mxu0 %v283
  %353 = vmatprep.subr.bf16.mxu0 0
  %354 = vmatpush1.bf16.msra.mxu0 %v284
  %355 = vmatprep.subr.bf16.mxu0 0
  %356 = vmatpush1.bf16.msra.mxu0 %v285
  %357 = vmatprep.subr.bf16.mxu0 0
  %358 = vmatpush1.bf16.msra.mxu0 %v286
  %359 = vmatprep.subr.bf16.mxu0 0
  %360 = vmatpush1.bf16.msra.mxu0 %v287
  %361 = vmatprep.subr.bf16.mxu0 0
  %362 = vmatpush1.bf16.msra.mxu0 %v288
  %363 = vmatprep.subr.bf16.mxu0 0
  %364 = vmatpush1.bf16.msra.mxu0 %v289
  %365 = vmatprep.subr.bf16.mxu0 0
  %366 = vmatpush1.bf16.msra.mxu0 %v290
  %367 = vmatprep.subr.bf16.mxu0 0
  %368 = vmatpush1.bf16.msra.mxu0 %v291
  %369 = vmatprep.subr.bf16.mxu0 0
  %370 = vmatpush1.bf16.msra.mxu0 %v292
  %371 = vmatprep.subr.bf16.mxu0 0
  %372 = vmatpush1.bf16.msra.mxu0 %v293
  %373 = vmatprep.subr.bf16.mxu0 0
  %374 = vmatpush1.bf16.msra.mxu0 %v294
  %375 = vmatprep.mubr.bf16.mxu0 %v136
  %376 = vmatmul.mubr.bf16.gmra.mrb[0].mxu0 %v135
  %v377 = vpop.f32.mrb[0].mxu0
  %v378 = vadd.f32 0.0, %v377
  %v379 = vpop.f32.mrb[0].mxu0
  %v380 = vpop.f32.mrb[0].mxu0
  %v381 = vadd.f32 0.0, %v380
  %v382 = vpop.f32.mrb[0].mxu0
  %383 = vmatprep.mubr.bf16.mxu0 %v140
  %384 = vmatmul.mubr.bf16.gmra.mrb[0].mxu0 %v139
  %v385 = vpop.f32.mrb[0].mxu0
  %v386 = vadd.f32 0.0, %v385
  %v387 = vpop.f32.mrb[0].mxu0
  %v388 = vpop.f32.mrb[0].mxu0
  %v389 = vadd.f32 0.0, %v388
  %v390 = vpop.f32.mrb[0].mxu0
  %391 = vdwg.mxu0
  %392 = vmatprep.subr.bf16.mxu0 0
  %393 = vmatpush1.bf16.msra.mxu0 %v295
  %394 = vmatprep.subr.bf16.mxu0 0
  %395 = vmatpush1.bf16.msra.mxu0 %v296
  %396 = vmatprep.subr.bf16.mxu0 0
  %397 = vmatpush1.bf16.msra.mxu0 %v297
  %398 = vmatprep.subr.bf16.mxu0 0
  %399 = vmatpush1.bf16.msra.mxu0 %v298
  %400 = vmatprep.subr.bf16.mxu0 0
  %401 = vmatpush1.bf16.msra.mxu0 %v299
  %402 = vmatprep.subr.bf16.mxu0 0
  %403 = vmatpush1.bf16.msra.mxu0 %v300
  %404 = vmatprep.subr.bf16.mxu0 0
  %405 = vmatpush1.bf16.msra.mxu0 %v301
  %406 = vmatprep.subr.bf16.mxu0 0
  %407 = vmatpush1.bf16.msra.mxu0 %v302
  %408 = vmatprep.subr.bf16.mxu0 0
  %409 = vmatpush1.bf16.msra.mxu0 %v303
  %410 = vmatprep.subr.bf16.mxu0 0
  %411 = vmatpush1.bf16.msra.mxu0 %v304
  %412 = vmatprep.subr.bf16.mxu0 0
  %413 = vmatpush1.bf16.msra.mxu0 %v305
  %414 = vmatprep.subr.bf16.mxu0 0
  %415 = vmatpush1.bf16.msra.mxu0 %v306
  %416 = vmatprep.subr.bf16.mxu0 0
  %417 = vmatpush1.bf16.msra.mxu0 %v307
  %418 = vmatprep.subr.bf16.mxu0 0
  %419 = vmatpush1.bf16.msra.mxu0 %v308
  %420 = vmatprep.subr.bf16.mxu0 0
  %421 = vmatpush1.bf16.msra.mxu0 %v309
  %422 = vmatprep.subr.bf16.mxu0 0
  %423 = vmatpush1.bf16.msra.mxu0 %v310
  %424 = vmatprep.mubr.bf16.mxu0 %v138
  %425 = vmatmul.mubr.bf16.gmra.mrb[0].mxu0 %v137
  %v426 = vpop.f32.mrb[0].mxu0
  %v427 = vadd.f32 %v378, %v426
  %v428 = vpop.f32.mrb[0].mxu0
  %v429 = vpop.f32.mrb[0].mxu0
  %v430 = vadd.f32 %v381, %v429
  %v431 = vpop.f32.mrb[0].mxu0
  %432 = vmatprep.mubr.bf16.mxu0 %v142
  %433 = vmatmul.mubr.bf16.gmra.mrb[0].mxu0 %v141
  %v434 = vpop.f32.mrb[0].mxu0
  %v435 = vadd.f32 %v386, %v434
  %v436 = vpop.f32.mrb[0].mxu0
  %v437 = vpop.f32.mrb[0].mxu0
  %v438 = vadd.f32 %v389, %v437
  %v439 = vpop.f32.mrb[0].mxu0
  %440 = vdwg.mxu0
  %v441 = vadd.f32 %v35, %v427
  %v442 = vadd.f32 %v36, %v430
  %v443 = vadd.f32 %v37, %v435
  %v444 = vadd.f32 %v38, %v438
  %445 = vst [vmem:[%s4] sm:$0xff] %v441
  %446 = vst [vmem:[%s4 + $0x8] sm:$0xff] %v442
  %447 = vst [vmem:[%s4 + $0x10] sm:$0xff] %v443
  %448 = vst [vmem:[%s4 + $0x18] sm:$0xff] %v444
  // Predicated region
  $region22: #{view_avg_aggregate.1} parent=0 // pred_check
    %p449 = pneg %p20
  $region23: #{view_avg_aggregate.1} parent=0 // pred_check_branch
    %451 = sbr.rel (%p449) target = $region25
  $region24: #{view_avg_aggregate.1} parent=0 // pred_region
    %v452 = vld [vmem:[%s3] sm:$0xff]
    %v453 = vld [vmem:[%s4] sm:$0xff]
    %v454 = vld [vmem:[%s4 + $0x8] sm:$0xff]
    %v455 = vld [vmem:[%s4 + $0x10] sm:$0xff]
    %v456 = vld [vmem:[%s4 + $0x18] sm:$0xff]
    %vm457 = vcmask 261120
    %v459 = vsel %vm457, %v452, 0
    %461 = vmatprep.subr.mxu0 0.0
    %462 = vmatpush1.msra.mxu0 %v453
    %463 = vmatprep.subr.mxu0 0.0
    %464 = vmatpush1.msra.mxu0 %v454
    %465 = vmatprep.subr.mxu0 0.0
    %466 = vmatpush1.msra.mxu0 %v455
    %467 = vmatprep.subr.mxu0 0.0
    %468 = vmatpush1.msra.mxu0 %v456
    %469 = vmatprep.subr.mxu0 0.0
    %470 = vmatpush1.msra.mxu0 0.0
    %471 = vmatprep.subr.mxu0 0.0
    %472 = vmatpush1.msra.mxu0 0.0
    %473 = vmatprep.subr.mxu0 0.0
    %474 = vmatpush1.msra.mxu0 0.0
    %475 = vmatprep.subr.mxu0 0.0
    %476 = vmatpush1.msra.mxu0 0.0
    %477 = vmatprep.subr.mxu0 0.0
    %478 = vmatpush1.msra.mxu0 0.0
    %479 = vmatprep.subr.mxu0 0.0
    %480 = vmatpush1.msra.mxu0 0.0
    %481 = vmatprep.subr.mxu0 0.0
    %482 = vmatpush1.msra.mxu0 0.0
    %483 = vmatprep.subr.mxu0 0.0
    %484 = vmatpush1.msra.mxu0 0.0
    %485 = vmatprep.subr.mxu0 0.0
    %486 = vmatpush1.msra.mxu0 0.0
    %487 = vmatprep.subr.mxu0 0.0
    %488 = vmatpush1.msra.mxu0 0.0
    %489 = vmatprep.subr.mxu0 0.0
    %490 = vmatpush1.msra.mxu0 0.0
    %491 = vmatprep.subr.mxu0 0.0
    %492 = vmatpush1.msra.mxu0 0.0
    %493 = vmatprep.subr.mxu0 0.0
    %494 = vmatpush1.msra.mxu0 0.0
    %495 = vmatprep.subr.mxu0 0.0
    %496 = vmatpush1.msra.mxu0 0.0
    %497 = vmatprep.subr.mxu0 0.0
    %498 = vmatpush1.msra.mxu0 0.0
    %499 = vmatprep.subr.mxu0 0.0
    %500 = vmatpush1.msra.mxu0 0.0
    %501 = vmatprep.subr.mxu0 0.0
    %502 = vmatpush1.msra.mxu0 0.0
    %503 = vmatprep.subr.mxu0 0.0
    %504 = vmatpush1.msra.mxu0 0.0
    %505 = vmatprep.subr.mxu0 0.0
    %506 = vmatpush1.msra.mxu0 0.0
    %507 = vmatprep.subr.mxu0 0.0
    %508 = vmatpush1.msra.mxu0 0.0
    %509 = vmatprep.subr.mxu0 0.0
    %510 = vmatpush1.msra.mxu0 0.0
    %511 = vmatprep.subr.mxu0 0.0
    %512 = vmatpush1.msra.mxu0 0.0
    %513 = vmatprep.subr.mxu0 0.0
    %514 = vmatpush1.msra.mxu0 0.0
    %515 = vmatprep.subr.mxu0 0.0
    %516 = vmatpush1.msra.mxu0 0.0
    %517 = vmatprep.subr.mxu0 0.0
    %518 = vmatpush1.msra.mxu0 0.0
    %519 = vmatprep.subr.mxu0 0.0
    %520 = vmatpush1.msra.mxu0 0.0
    %521 = vmatprep.subr.mxu0 0.0
    %522 = vmatpush1.msra.mxu0 0.0
    %523 = vmatprep.subr.mxu0 0.0
    %524 = vmatpush1.msra.mxu0 0.0
    %525 = vmatprep.mubr.f32.mxu0 0.0
    %526 = vmatmul.mubr.f32.gmra.mrb[0].mxu0 %v459
    %v527 = vpop.f32.mrb[0].mxu0
    %v528 = vadd.f32 0.0, %v527
    %v529 = vpop.f32.mrb[0].mxu0
    %530 = vdwg.mxu0
    %531 = vst [vmem:[%s5] sm:$0xff] %v528
  $region25: #{view_avg_aggregate.1} parent=0 // pred_fallthru
    _
  // Predicated region
  $region26: #{view_avg_aggregate.1} parent=0 // pred_check
    _
  $region27: #{view_avg_aggregate.1} parent=0 // pred_check_branch
    %533 = sbr.rel (0) target = $region29
  $region28: #{view_avg_aggregate.1} parent=0 // pred_region
    _
  $region29: #{view_avg_aggregate.1} parent=0 // pred_fallthru
    _
  // Predicated region
  $region30: #{view_avg_aggregate.1} parent=0 // pred_check
    _
  $region31: #{view_avg_aggregate.1} parent=0 // pred_check_branch
    %535 = sbr.rel (0) target = $region33
  $region32: #{view_avg_aggregate.1} parent=0 // pred_region
    _
  $region33: #{view_avg_aggregate.1} parent=0 // pred_fallthru
    _
  // Predicated region
  $region34: #{view_avg_aggregate.1} parent=0 // pred_check
    _
  $region35: #{view_avg_aggregate.1} parent=0 // pred_check_branch
    %537 = sbr.rel (0) target = $region37
  $region36: #{view_avg_aggregate.1} parent=0 // pred_region
    _
  $region37: #{view_avg_aggregate.1} parent=0 // pred_fallthru
    _
  // Predicated region
  $region38: #{view_avg_aggregate.1} parent=0 // pred_check
    _
  $region39: #{view_avg_aggregate.1} parent=0 // pred_check_branch
    %539 = sbr.rel (0) target = $region41
  $region40: #{view_avg_aggregate.1} parent=0 // pred_region
    _
  $region41: #{view_avg_aggregate.1} parent=0 // pred_fallthru
    _

</llo_original>
